<compile_context>
chip_gen: v7x
topology: tpu7x:2x2x1
jax: 0.10.0
libtpu: 0.0.40
codegen_flags: <defaults>
</compile_context>

<pallas_src>
import numpy as np
import jax
import jax.numpy as jnp
from jax.experimental import pallas as pl
from jax.experimental.pallas import tpu as pltpu


# ----------------------------------------------------------------------------
# Parameter construction (mirrors torch STFT.__init__) -- plain numpy glue.
# ----------------------------------------------------------------------------
def _round_up(x, m):
    return ((x + m - 1) // m) * m


def _hann_window_periodic(n):
    # scipy.signal.get_window('hann', n, fftbins=True)
    return (0.5 - 0.5 * np.cos(2.0 * np.pi * np.arange(n) / n)).astype(np.float64)


def _pad_center(w, size):
    n = len(w)
    lpad = (size - n) // 2
    return np.pad(w, (lpad, size - n - lpad))


def _make_stft_bases(filter_length, hop_length, win_length):
    scale = filter_length / hop_length
    fourier_basis = np.fft.fft(np.eye(filter_length))
    cutoff = filter_length // 2 + 1
    fourier_basis = np.vstack(
        [np.real(fourier_basis[:cutoff, :]), np.imag(fourier_basis[:cutoff, :])]
    )
    forward_basis = fourier_basis.astype(np.float32)                              # (2*cutoff, L)
    inverse_basis = np.linalg.pinv(scale * fourier_basis).T.astype(np.float32)    # (2*cutoff, L)

    assert filter_length >= win_length
    fft_window = _pad_center(_hann_window_periodic(win_length), filter_length)
    fft_window = fft_window.astype(np.float32)
    forward_basis = forward_basis * fft_window[None, :]
    inverse_basis = inverse_basis * fft_window[None, :]
    return forward_basis, inverse_basis, fft_window, cutoff


# ----------------------------------------------------------------------------
# Pallas kernels (matmul hot paths; bf16 MXU operands, f32 accumulation).
# ----------------------------------------------------------------------------
def stft_forward_kernel(frames_ref, fwd_ref, spec_ref):
    """frames: (tile, L) f32; fwd: (L, 2*cpad) bf16 -> packed spectrum (tile, 2*cpad) f32."""
    f = frames_ref[...].astype(jnp.bfloat16)
    spec_ref[...] = jnp.dot(f, fwd_ref[...], preferred_element_type=jnp.float32)


def istft_kernel(act_mag_ref, act_ph_ref, inv_ref, frames_ref):
    """Packed activation = act_mag * cos(act_ph) (imag lanes carry phase-pi/2, i.e. sin);
    one fused (tile, 2*cpad) @ (2*cpad, L) contraction."""
    act = (act_mag_ref[...] * jnp.cos(act_ph_ref[...])).astype(jnp.bfloat16)
    frames_ref[...] = jnp.dot(act, inv_ref[...], preferred_element_type=jnp.float32)


def roundtrip_kernel(frames_ref, fwd_ref, inv_ref, out_ref):
    """Fused forward+inverse: the spectrum never leaves VMEM."""
    f = frames_ref[...].astype(jnp.bfloat16)
    spec = jnp.dot(f, fwd_ref[...], preferred_element_type=jnp.float32)
    out_ref[...] = jnp.dot(spec.astype(jnp.bfloat16), inv_ref[...],
                           preferred_element_type=jnp.float32)


# ----------------------------------------------------------------------------
# Module-equivalent wrapper.
# ----------------------------------------------------------------------------
class STFT:
    def __init__(self, filter_length=1024, hop_length=512, win_length=None,
                 window="hann", row_tile=512):
        if window is not None and window != "hann":
            # TODO(synk): only the 'hann' window is implemented (matches default usage).
            raise NotImplementedError("only window='hann' is supported")
        self.filter_length = filter_length
        self.hop_length = hop_length
        self.win_length = win_length if win_length is not None else filter_length
        self.window = window
        self.row_tile = max(8, _round_up(row_tile, 8))

        L = filter_length
        fb, ib, win, cutoff = _make_stft_bases(L, hop_length, self.win_length)
        self.cutoff = cutoff                      # L/2 + 1 real frequency bins
        self.cpack = L // 2                       # packed bins (Nyquist folded into imag-DC slot)
        self.cpad = _round_up(self.cpack, 128)    # lane-dense packed width (512 for L=1024)
        self.wpad = 2 * self.cpad                 # concatenated [real | imag] width
        Cp, cpad, W = self.cpack, self.cpad, self.wpad

        # Packed forward basis (L, 2*cpad):
        #   cols [0, Cp)          -> real bins 0..Cp-1
        #   col  cpad             -> Nyquist real (imag-DC slot is exactly zero)
        #   cols [cpad+1,cpad+Cp) -> imag bins 1..Cp-1
        fwd = np.zeros((L, W), np.float32)
        fwd[:, :Cp] = fb[:Cp].T
        fwd[:, cpad] = fb[Cp]
        fwd[:, cpad + 1:cpad + Cp] = fb[cutoff + 1:cutoff + Cp].T
        # Packed inverse basis (2*cpad, L), same row ordering (imag-DC / imag-Nyquist
        # rows of the pinv are exactly zero, so dropping them is exact).
        inv = np.zeros((W, L), np.float32)
        inv[:Cp] = ib[:Cp]
        inv[cpad] = ib[Cp]
        inv[cpad + 1:cpad + Cp] = ib[cutoff + 1:cutoff + Cp]

        # bf16 bases: MXU-native on v5e/v6e/v7x, halves resident VMEM.
        self.fwd_basis = jnp.asarray(fwd, dtype=jnp.bfloat16)   # (L, 2*cpad)
        self.inv_basis = jnp.asarray(inv, dtype=jnp.bfloat16)   # (2*cpad, L)
        self.fft_window = win                                   # numpy float32, length L

        self._scale_cache = {}                                  # keyed on (nf, n_out)
        self._last_input = None
        self._magnitude = None
        self._phase = None
        self._compiler_params = pltpu.CompilerParams(
            dimension_semantics=("parallel",),    # shard row tiles across TCs (v7x)
            vmem_limit_bytes=48 * 1024 * 1024,    # safe on v7x (64 MiB phys), ample elsewhere
        )
        # TODO(synk): single-buffer the constant-index_map bases via
        # pipeline_mode=pl.Buffered(1) once the grid pipeline supports it; double
        # buffering costs ~4 MiB of dead VMEM at L=1024 (bf16).

    # -- helpers --------------------------------------------------------------
    def _pick_tile(self, n_rows):
        tile = min(self.row_tile, _round_up(n_rows, 8))
        # Keep >=2 grid steps when tiles are large so the 1-D "parallel" grid can
        # actually be sharded across both TensorCores on v7x.
        if tile >= 256 and _round_up(n_rows, tile) == tile:
            tile = _round_up(-(-n_rows // 2), 8)
        return max(8, tile)

    def _frame(self, input_data):
        B, T = input_data.shape
        L, hop = self.filter_length, self.hop_length
        pad = L // 2
        xp = jnp.pad(input_data.astype(jnp.float32), ((0, 0), (pad, pad)), mode="reflect")
        Tp = xp.shape[1]
        nf = (Tp - L) // hop + 1
        if L % hop == 0 and Tp % hop == 0:
            # Cheap framing: reshape to hop-sized chunks and concatenate shifted views
            # (no XLA gather).  TODO(synk): fusing the framing into the kernel (split
            # basis at hop boundaries) would halve input-side HBM reads at 50% overlap.
            r = L // hop
            hops = xp.reshape(B, Tp // hop, hop)
            frames = jnp.concatenate([hops[:, j:j + nf] for j in range(r)], axis=-1)
        else:
            idx = (jnp.arange(nf) * hop)[:, None] + jnp.arange(L)[None, :]
            frames = xp[:, idx]
        return frames.reshape(B * nf, L), B, nf

    def _pad_rows(self, arrs, n_rows):
        tile = self._pick_tile(n_rows)
        n_pad = _round_up(n_rows, tile)
        if n_pad != n_rows:
            arrs = [jnp.pad(a, ((0, n_pad - n_rows), (0, 0))) for a in arrs]
        return arrs, tile, n_pad

    # -- pallas_call wrappers --------------------------------------------------
    def _run_forward(self, frames):
        n_rows, L = frames.shape
        W = self.wpad
        (frames,), tile, n_pad = self._pad_rows([frames], n_rows)
        spec = pl.pallas_call(
            stft_forward_kernel,
            out_shape=jax.ShapeDtypeStruct((n_pad, W), jnp.float32),
            grid=(n_pad // tile,),
            in_specs=[
                pl.BlockSpec((tile, L), lambda i: (i, 0)),   # streamed row tiles
                pl.BlockSpec((L, W), lambda i: (0, 0)),      # fused fwd basis resident
            ],
            out_specs=pl.BlockSpec((tile, W), lambda i: (i, 0)),
            compiler_params=self._compiler_params,
        )(frames, self.fwd_basis)
        return spec[:n_rows]

    def _run_inverse(self, act_mag, act_ph):
        n_rows = act_mag.shape[0]
        L, W = self.filter_length, self.wpad
        (act_mag, act_ph), tile, n_pad = self._pad_rows([act_mag, act_ph], n_rows)
        frames = pl.pallas_call(
            istft_kernel,
            out_shape=jax.ShapeDtypeStruct((n_pad, L), jnp.float32),
            grid=(n_pad // tile,),
            in_specs=[
                pl.BlockSpec((tile, W), lambda i: (i, 0)),
                pl.BlockSpec((tile, W), lambda i: (i, 0)),
                pl.BlockSpec((W, L), lambda i: (0, 0)),      # fused inv basis resident
            ],
            out_specs=pl.BlockSpec((tile, L), lambda i: (i, 0)),
            compiler_params=self._compiler_params,
        )(act_mag, act_ph, self.inv_basis)
        return frames[:n_rows]

    def _run_roundtrip(self, frames):
        n_rows, L = frames.shape
        W = self.wpad
        (frames,), tile, n_pad = self._pad_rows([frames], n_rows)
        out = pl.pallas_call(
            roundtrip_kernel,
            out_shape=jax.ShapeDtypeStruct((n_pad, L), jnp.float32),
            grid=(n_pad // tile,),
            in_specs=[
                pl.BlockSpec((tile, L), lambda i: (i, 0)),
                pl.BlockSpec((L, W), lambda i: (0, 0)),
                pl.BlockSpec((W, L), lambda i: (0, 0)),
            ],
            out_specs=pl.BlockSpec((tile, L), lambda i: (i, 0)),
            compiler_params=self._compiler_params,
        )(frames, self.fwd_basis, self.inv_basis)
        return out[:n_rows]

    # -- epilogue (plain-JAX glue) ---------------------------------------------
    def _overlap_add(self, frames_inv, B, nf):
        """conv_transpose1d(stride=hop) == overlap-add of iSTFT frames."""
        L, hop = self.filter_length, self.hop_length
        n_out = (nf - 1) * hop + L
        if L % hop == 0:
            r = L // hop
            f = frames_inv.reshape(B, nf, r, hop)
            out = jnp.zeros((B, nf + r - 1, hop), jnp.float32)
            for j in range(r):
                out = out.at[:, j:j + nf].add(f[:, :, j])
            return out.reshape(B, n_out)
        idx = (jnp.arange(nf) * hop)[:, None] + jnp.arange(L)[None, :]
        return jnp.zeros((B, n_out), jnp.float32).at[:, idx].add(frames_inv)

    def _inv_scale(self, nf, n_out):
        """(L/hop) / window_sumsquare folded into a single cached multiplier."""
        key = (nf, n_out)
        if key not in self._scale_cache:
            L, hop = self.filter_length, self.hop_length
            wsq = self.fft_window.astype(np.float64) ** 2
            idx = (np.arange(nf) * hop)[:, None] + np.arange(L)[None, :]
            wsum = np.zeros(n_out, dtype=np.float64)
            np.add.at(wsum, idx.reshape(-1), np.tile(wsq, nf))
            tiny = np.finfo(np.float32).tiny
            scale = np.where(wsum > tiny, (float(L) / hop) / wsum, float(L) / hop)
            self._scale_cache[key] = jnp.asarray(scale.astype(np.float32))
        return self._scale_cache[key]

    def _finish_inverse(self, frames_rows, B, nf):
        L = self.filter_length
        inv = self._overlap_add(frames_rows.reshape(B, nf, L), B, nf)
        n_out = inv.shape[1]
        inv = inv * self._inv_scale(nf, n_out)
        return inv[:, L // 2: n_out - L // 2]

    # -- STFT -----------------------------------------------------------------
    def transform(self, input_data):
        frames, B, nf = self._frame(input_data)
        spec = self._run_forward(frames)                      # (B*nf, 2*cpad), packed
        Cp, cpad, cutoff = self.cpack, self.cpad, self.cutoff
        rows = B * nf
        zcol = jnp.zeros((rows, 1), jnp.float32)
        real = jnp.concatenate([spec[:, :Cp], spec[:, cpad:cpad + 1]], axis=-1)
        imag = jnp.concatenate([zcol, spec[:, cpad + 1:cpad + Cp], zcol], axis=-1)
        magnitude = jnp.sqrt(real * real + imag * imag)
        # TODO(synk): atan2 has no guaranteed Mosaic lowering; phase stays in plain JAX.
        phase = jnp.arctan2(imag, real)
        magnitude = magnitude.reshape(B, nf, cutoff).transpose(0, 2, 1)
        phase = phase.reshape(B, nf, cutoff).transpose(0, 2, 1)
        return magnitude, phase

    # -- iSTFT ----------------------------------------------------------------
    def inverse(self, magnitude, phase):
        B, C, nf = magnitude.shape
        assert C == self.cutoff, (C, self.cutoff)
        rows = B * nf
        Cp, cpad = self.cpack, self.cpad
        mag2 = magnitude.transpose(0, 2, 1).reshape(rows, C).astype(jnp.float32)
        ph2 = phase.transpose(0, 2, 1).reshape(rows, C).astype(jnp.float32)
        zpad = jnp.zeros((rows, cpad - Cp), jnp.float32)
        # Packed activation layout matching the inverse basis:
        #   [real 0..Cp-1 | pad | NyquistReal, imag 1..Cp-1 | pad]
        # kernel computes act_mag*cos(act_ph); imag lanes carry phase-pi/2 (cos->sin).
        act_mag = jnp.concatenate(
            [mag2[:, :Cp], zpad, mag2[:, Cp:Cp + 1], mag2[:, 1:Cp], zpad], axis=-1)
        act_ph = jnp.concatenate(
            [ph2[:, :Cp], zpad, ph2[:, Cp:Cp + 1], ph2[:, 1:Cp] - (np.pi / 2), zpad], axis=-1)
        frames = self._run_inverse(act_mag, act_ph)
        return self._finish_inverse(frames, B, nf)

    # -- lazy magnitude / phase attributes -------------------------------------
    @property
    def magnitude(self):
        if self._magnitude is None:
            if self._last_input is None:
                raise AttributeError("magnitude is available after calling the module")
            self._magnitude, self._phase = self.transform(self._last_input)
        return self._magnitude

    @property
    def phase(self):
        if self._phase is None:
            _ = self.magnitude
        return self._phase

    # -- forward (transform -> inverse), fully fused ---------------------------
    def __call__(self, input_data):
        self._last_input = input_data
        self._magnitude = None
        self._phase = None
        frames, B, nf = self._frame(input_data)
        frames_inv = self._run_roundtrip(frames)   # spectrum never leaves VMEM
        return self._finish_inverse(frames_inv, B, nf)

    forward = __call__


# ----------------------------------------------------------------------------
if __name__ == "__main__":
    key = jax.random.PRNGKey(0)
    B, T = 2, 256
    filter_length, hop_length = 64, 32   # 50% overlap, same structure as 1024/512
    x = jax.random.normal(key, (B, T), dtype=jnp.float32)

    stft = STFT(filter_length=filter_length, hop_length=hop_length,
                win_length=filter_length, window="hann")

    # fused roundtrip (module forward)
    y = stft(x)
    jax.block_until_ready(y)
    assert y.shape == (B, T) and y.dtype == jnp.float32, (y.shape, y.dtype)

    # lazy magnitude/phase attributes (computed on demand via the transform kernel)
    nf = T // hop_length + 1
    assert stft.magnitude.shape == (B, stft.cutoff, nf)
    assert stft.phase.shape == (B, stft.cutoff, nf)

    # standalone transform / inverse path (module API)
    mag, ph = stft.transform(x)
    y2 = stft.inverse(mag, ph)
    jax.block_until_ready(y2)
    assert y2.shape == (B, T), y2.shape

    # --- correctness checks --------------------------------------------------
    # forward kernel vs. numpy rfft reference (bf16 MXU operands => ~0.5% error)
    pad = filter_length // 2
    x_np = np.asarray(x, dtype=np.float64)
    xp_np = np.pad(x_np, ((0, 0), (pad, pad)), mode="reflect")
    win = np.asarray(stft.fft_window, dtype=np.float64)
    fr = np.stack([xp_np[:, i * hop_length:i * hop_length + filter_length]
                   for i in range(nf)], axis=1)
    mag_ref = np.abs(np.fft.rfft(fr * win, axis=-1)).transpose(0, 2, 1)
    rel = np.max(np.abs(np.asarray(mag, dtype=np.float64) - mag_ref)) / mag_ref.max()
    assert rel < 2e-2, rel

    # interior reconstruction (hann / 50% overlap => near-perfect; tolerance covers
    # bf16 matmul operands on both the fused roundtrip and the mag/phase path)
    err = float(jnp.max(jnp.abs(y[:, filter_length:-filter_length]
                                - x[:, filter_length:-filter_length])))
    err2 = float(jnp.max(jnp.abs(y2[:, filter_length:-filter_length]
                                 - x[:, filter_length:-filter_length])))
    assert err < 1e-1 and err2 < 1e-1, (err, err2)

    print("KERNEL_OK")
</pallas_src>

<mosaic_0001>
module attributes {stable_mosaic.version = 11 : i64} {
  func.func @roundtrip_kernel(%arg0: i32, %arg1: memref<24x64xf32, #tpu.memory_space<vmem>>, %arg2: memref<64x256xbf16, #tpu.memory_space<vmem>>, %arg3: memref<256x64xbf16, #tpu.memory_space<vmem>>, %arg4: memref<24x64xf32, #tpu.memory_space<vmem>>) attributes {dimension_semantics = [#tpu.dimension_semantics<parallel>], iteration_bounds = array<i64: 1>, scalar_prefetch = 0 : i64, scratch_operands = 0 : i64, tpu.core_type = #tpu.core_type<tc>, window_params = [{transform_indices = @transform_0, window_bounds = array<i64: 24, 64>}, {pipeline_mode = #tpu.pipeline_mode<synchronous>, transform_indices = @transform_1, window_bounds = array<i64: 64, 256>}, {pipeline_mode = #tpu.pipeline_mode<synchronous>, transform_indices = @transform_2, window_bounds = array<i64: 256, 64>}, {transform_indices = @transform_3, window_bounds = array<i64: 24, 64>}]} {
    %c0 = arith.constant 0 : index
    %c0_0 = arith.constant 0 : index
    %0 = vector.load %arg1[%c0, %c0_0] : memref<24x64xf32, #tpu.memory_space<vmem>>, vector<24x64xf32>
    %1 = arith.truncf %0 : vector<24x64xf32> to vector<24x64xbf16>
    %c0_1 = arith.constant 0 : index
    %c0_2 = arith.constant 0 : index
    %2 = vector.load %arg2[%c0_1, %c0_2] : memref<64x256xbf16, #tpu.memory_space<vmem>>, vector<64x256xbf16>
    %cst = arith.constant dense<0.000000e+00> : vector<24x256xf32>
    %3 = tpu.matmul %1, %2, %cst {dimension_numbers = #tpu.dot_dimension_numbers<[1], [0], [0], [1], [0, 0, 1, 1], [], []>} : vector<24x64xbf16>, vector<64x256xbf16>, vector<24x256xf32> -> vector<24x256xf32>
    %4 = arith.truncf %3 : vector<24x256xf32> to vector<24x256xbf16>
    %c0_3 = arith.constant 0 : index
    %c0_4 = arith.constant 0 : index
    %5 = vector.load %arg3[%c0_3, %c0_4] : memref<256x64xbf16, #tpu.memory_space<vmem>>, vector<256x64xbf16>
    %cst_5 = arith.constant dense<0.000000e+00> : vector<24x64xf32>
    %6 = tpu.matmul %4, %5, %cst_5 {dimension_numbers = #tpu.dot_dimension_numbers<[1], [0], [0], [1], [0, 0, 1, 1], [], []>} : vector<24x256xbf16>, vector<256x64xbf16>, vector<24x64xf32> -> vector<24x64xf32>
    %c0_6 = arith.constant 0 : index
    %c0_7 = arith.constant 0 : index
    %7 = vector.load %arg4[%c0_6, %c0_7] : memref<24x64xf32, #tpu.memory_space<vmem>>, vector<24x64xf32>
    tpu.vector_store %arg4[%c0_6, %c0_7], %6 {strides = array<i32>} : memref<24x64xf32, #tpu.memory_space<vmem>>, vector<24x64xf32>,
    return
  }
  func.func @transform_0(%arg0: i32) -> (i32, i32) {
    %c0_i32 = arith.constant 0 : i32
    %c0_i32_0 = arith.constant 0 : i32
    return %arg0, %c0_i32 : i32, i32
  }
  func.func @transform_1(%arg0: i32) -> (i32, i32) {
    %c0_i32 = arith.constant 0 : i32
    %c0_i32_0 = arith.constant 0 : i32
    %c0_i32_1 = arith.constant 0 : i32
    return %c0_i32, %c0_i32_0 : i32, i32
  }
  func.func @transform_2(%arg0: i32) -> (i32, i32) {
    %c0_i32 = arith.constant 0 : i32
    %c0_i32_0 = arith.constant 0 : i32
    %c0_i32_1 = arith.constant 0 : i32
    return %c0_i32, %c0_i32_0 : i32, i32
  }
  func.func @transform_3(%arg0: i32) -> (i32, i32) {
    %c0_i32 = arith.constant 0 : i32
    %c0_i32_0 = arith.constant 0 : i32
    return %arg0, %c0_i32 : i32, i32
  }
}

</mosaic_0001>

<llo_original>
// kernel: tpu_custom_call.1
$region0: #{tpu_custom_call.1}
  #allocation0 [shape = 'u32[]', space=smem, size = 0x4, offset = 0x4, fixed_abs, tag = 'smem constant byte address 0x4 - core index']
  #allocation1 [shape = 'u32[144,128]{1,0:T(1,128)}', space=vmem, size = 0x12000, scoped, tag = 'internal scratch']
  %s0 = inlined_call_operand.vmem [shape: f32[24,64], index: 0, kind: input, shape index: {}]
  %s1 = inlined_call_operand.vmem [shape: bf16[64,256], index: 1, kind: input, shape index: {}]
  %s2 = inlined_call_operand.vmem [shape: bf16[256,64], index: 2, kind: input, shape index: {}]
  %s3 = inlined_call_operand.hbm [shape: f32[24,64], index: 3, kind: output, shape index: {}]
  %s4 = sld [smem:[#allocation0]]
  $region22: #{tpu_custom_call.1} parent=0
    _
  %s6 = ssub.s32 1, %s4
  %s7 = scalar_select 0, %s6, %s4
  $region1: #{tpu_custom_call.1} parent=0
    #allocation2 [shape = 'u8[12288]{0}', space=vmem, size = 0x3000, scoped, tag = 'output window, operand 0, single buffered']
    #allocation3 [shape = 's32[1]{0}', space=sflag, size = 0x4, scoped, tag = 'scoped memory for tpu_custom_call.1']
    %8 = vsyncpa [#allocation3], 0
    // Predicated region
    $region2: #{tpu_custom_call.1} parent=1 // pred_check
      _
    $region3: #{tpu_custom_call.1} parent=1 // pred_check_branch
      %10 = sbr.rel (0) target = $region5
    $region4: #{tpu_custom_call.1} parent=1 // pred_region
      _
    $region5: #{tpu_custom_call.1} parent=1 // pred_fallthru
      _
    // Predicated region
    $region6: #{tpu_custom_call.1} parent=1 // pred_check
      _
    $region7: #{tpu_custom_call.1} parent=1 // pred_check_branch
      %12 = sbr.rel (0) target = $region9
    $region8: #{tpu_custom_call.1} parent=1 // pred_region
      _
    $region9: #{tpu_custom_call.1} parent=1 // pred_fallthru
      _
    // Predicated region
    $region10: #{tpu_custom_call.1} parent=1 // pred_check
      _
    $region11: #{tpu_custom_call.1} parent=1 // pred_check_branch
      %14 = sbr.rel (0) target = $region13
    $region12: #{tpu_custom_call.1} parent=1 // pred_region
      _
    $region13: #{tpu_custom_call.1} parent=1 // pred_fallthru
      _
    %v16 = vld [vmem:[%s0] sm:$0xff]
    %v17 = vld [vmem:[%s0 + $0x8] sm:$0xff]
    %v18 = vld [vmem:[%s0 + $0x10] sm:$0xff]
    %v19 = vpack.c.bf16 %v17, %v16
    %v20 = vpack.c.bf16 %v18, %v18
    %v21 = vld [vmem:[%s1] sm:$0xff]
    %v22 = vld [vmem:[%s1 + $0x8] sm:$0xff]
    %v23 = vld [vmem:[%s1 + $0x10] sm:$0xff]
    %v24 = vld [vmem:[%s1 + $0x18] sm:$0xff]
    %v25 = vld [vmem:[%s1 + $0x20] sm:$0xff]
    %v26 = vld [vmem:[%s1 + $0x28] sm:$0xff]
    %v27 = vld [vmem:[%s1 + $0x30] sm:$0xff]
    %v28 = vld [vmem:[%s1 + $0x38] sm:$0xff]
    %v37 = vunpack.c.l.b16 %v21
    %v38 = vunpack.c.h.b16 %v21
    %v39 = vunpack.c.l.b16 %v22
    %v40 = vunpack.c.h.b16 %v22
    %v41 = vunpack.c.l.b16 %v23
    %v42 = vunpack.c.h.b16 %v23
    %v43 = vunpack.c.l.b16 %v24
    %v44 = vunpack.c.h.b16 %v24
    %v45 = vunpack.c.l.b16 %v25
    %v46 = vunpack.c.h.b16 %v25
    %v47 = vunpack.c.l.b16 %v26
    %v48 = vunpack.c.h.b16 %v26
    %v49 = vunpack.c.l.b16 %v27
    %v50 = vunpack.c.h.b16 %v27
    %v51 = vunpack.c.l.b16 %v28
    %v52 = vunpack.c.h.b16 %v28
    %v53 = vpack.c.b16 %v39, %v37
    %v54 = vpack.c.b16 %v40, %v38
    %v55 = vpack.c.b16 %v43, %v41
    %v56 = vpack.c.b16 %v44, %v42
    %v57 = vpack.c.b16 %v47, %v45
    %v58 = vpack.c.b16 %v48, %v46
    %v59 = vpack.c.b16 %v51, %v49
    %v60 = vpack.c.b16 %v52, %v50
    %vm69 = vcmask 523264
    %v71 = vsel %vm69, %v19, 0
    %v74 = vsel %vm69, %v20, 0
    %76 = vmatprep.subr.bf16.mxu0 %v54
    %77 = vmatpush1.bf16.msra.mxu0 %v53
    %78 = vmatprep.subr.bf16.mxu0 %v56
    %79 = vmatpush1.bf16.msra.mxu0 %v55
    %80 = vmatprep.subr.bf16.mxu0 %v58
    %81 = vmatpush1.bf16.msra.mxu0 %v57
    %82 = vmatprep.subr.bf16.mxu0 %v60
    %83 = vmatpush1.bf16.msra.mxu0 %v59
    %84 = vmatprep.subr.bf16.mxu0 0
    %85 = vmatpush1.bf16.msra.mxu0 0
    %86 = vmatprep.subr.bf16.mxu0 0
    %87 = vmatpush1.bf16.msra.mxu0 0
    %88 = vmatprep.subr.bf16.mxu0 0
    %89 = vmatpush1.bf16.msra.mxu0 0
    %90 = vmatprep.subr.bf16.mxu0 0
    %91 = vmatpush1.bf16.msra.mxu0 0
    %92 = vmatprep.subr.bf16.mxu0 0
    %93 = vmatpush1.bf16.msra.mxu0 0
    %94 = vmatprep.subr.bf16.mxu0 0
    %95 = vmatpush1.bf16.msra.mxu0 0
    %96 = vmatprep.subr.bf16.mxu0 0
    %97 = vmatpush1.bf16.msra.mxu0 0
    %98 = vmatprep.subr.bf16.mxu0 0
    %99 = vmatpush1.bf16.msra.mxu0 0
    %100 = vmatprep.subr.bf16.mxu0 0
    %101 = vmatpush1.bf16.msra.mxu0 0
    %102 = vmatprep.subr.bf16.mxu0 0
    %103 = vmatpush1.bf16.msra.mxu0 0
    %104 = vmatprep.subr.bf16.mxu0 0
    %105 = vmatpush1.bf16.msra.mxu0 0
    %106 = vmatprep.subr.bf16.mxu0 0
    %107 = vmatpush1.bf16.msra.mxu0 0
    %108 = vmatprep.mubr.bf16.mxu0 0
    %109 = vmatmul.mubr.bf16.gmra.mrb[0].mxu0 %v71
    %v110 = vpop.f32.mrb[0].mxu0
    %v111 = vadd.f32 0.0, %v110
    %v112 = vpop.f32.mrb[0].mxu0
    %v113 = vadd.f32 0.0, %v112
    %v114 = vpop.f32.mrb[0].mxu0
    %v115 = vadd.f32 0.0, %v114
    %v116 = vpop.f32.mrb[0].mxu0
    %v117 = vadd.f32 0.0, %v116
    %118 = vmatprep.mubr.bf16.mxu0 0
    %119 = vmatmul.mubr.bf16.gmra.mrb[0].mxu0 %v74
    %v120 = vpop.f32.mrb[0].mxu0
    %v121 = vadd.f32 0.0, %v120
    %v122 = vpop.f32.mrb[0].mxu0
    %v123 = vadd.f32 0.0, %v122
    %v124 = vpop.f32.mrb[0].mxu0
    %v125 = vpop.f32.mrb[0].mxu0
    %126 = vdwg.mxu0
    %v127 = vpack.c.bf16 %v115, %v111
    %v128 = vpack.c.bf16 %v117, %v113
    %v129 = vpack.c.bf16 %v121, %v121
    %v130 = vpack.c.bf16 %v123, %v123
    %v131 = vld [vmem:[%s2] sm:$0xf]
    %v132 = vld [vmem:[%s2 + $0x4] sm:$0xf]
    %v133 = vld [vmem:[%s2 + $0x8] sm:$0xf]
    %v134 = vld [vmem:[%s2 + $0xc] sm:$0xf]
    %v135 = vld [vmem:[%s2 + $0x10] sm:$0xf]
    %v136 = vld [vmem:[%s2 + $0x14] sm:$0xf]
    %v137 = vld [vmem:[%s2 + $0x18] sm:$0xf]
    %v138 = vld [vmem:[%s2 + $0x1c] sm:$0xf]
    %v139 = vld [vmem:[%s2 + $0x20] sm:$0xf]
    %v140 = vld [vmem:[%s2 + $0x24] sm:$0xf]
    %v141 = vld [vmem:[%s2 + $0x28] sm:$0xf]
    %v142 = vld [vmem:[%s2 + $0x2c] sm:$0xf]
    %v143 = vld [vmem:[%s2 + $0x30] sm:$0xf]
    %v144 = vld [vmem:[%s2 + $0x34] sm:$0xf]
    %v145 = vld [vmem:[%s2 + $0x38] sm:$0xf]
    %v146 = vld [vmem:[%s2 + $0x3c] sm:$0xf]
    %v147 = vld [vmem:[%s2 + $0x40] sm:$0xf]
    %v148 = vld [vmem:[%s2 + $0x44] sm:$0xf]
    %v149 = vld [vmem:[%s2 + $0x48] sm:$0xf]
    %v150 = vld [vmem:[%s2 + $0x4c] sm:$0xf]
    %v151 = vld [vmem:[%s2 + $0x50] sm:$0xf]
    %v152 = vld [vmem:[%s2 + $0x54] sm:$0xf]
    %v153 = vld [vmem:[%s2 + $0x58] sm:$0xf]
    %v154 = vld [vmem:[%s2 + $0x5c] sm:$0xf]
    %v155 = vld [vmem:[%s2 + $0x60] sm:$0xf]
    %v156 = vld [vmem:[%s2 + $0x64] sm:$0xf]
    %v157 = vld [vmem:[%s2 + $0x68] sm:$0xf]
    %v158 = vld [vmem:[%s2 + $0x6c] sm:$0xf]
    %v159 = vld [vmem:[%s2 + $0x70] sm:$0xf]
    %v160 = vld [vmem:[%s2 + $0x74] sm:$0xf]
    %v161 = vld [vmem:[%s2 + $0x78] sm:$0xf]
    %v162 = vld [vmem:[%s2 + $0x7c] sm:$0xf]
    %v195 = vunpack.c.l.b16 %v131
    %v196 = vunpack.c.l.b16 %v132
    %v197 = vunpack.c.l.b16 %v133
    %v198 = vunpack.c.l.b16 %v134
    %v199 = vunpack.c.l.b16 %v135
    %v200 = vunpack.c.l.b16 %v136
    %v201 = vunpack.c.l.b16 %v137
    %v202 = vunpack.c.l.b16 %v138
    %v203 = vunpack.c.l.b16 %v139
    %v204 = vunpack.c.l.b16 %v140
    %v205 = vunpack.c.l.b16 %v141
    %v206 = vunpack.c.l.b16 %v142
    %v207 = vunpack.c.l.b16 %v143
    %v208 = vunpack.c.l.b16 %v144
    %v209 = vunpack.c.l.b16 %v145
    %v210 = vunpack.c.l.b16 %v146
    %v211 = vunpack.c.l.b16 %v147
    %v212 = vunpack.c.l.b16 %v148
    %v213 = vunpack.c.l.b16 %v149
    %v214 = vunpack.c.l.b16 %v150
    %v215 = vunpack.c.l.b16 %v151
    %v216 = vunpack.c.l.b16 %v152
    %v217 = vunpack.c.l.b16 %v153
    %v218 = vunpack.c.l.b16 %v154
    %v219 = vunpack.c.l.b16 %v155
    %v220 = vunpack.c.l.b16 %v156
    %v221 = vunpack.c.l.b16 %v157
    %v222 = vunpack.c.l.b16 %v158
    %v223 = vunpack.c.l.b16 %v159
    %v224 = vunpack.c.l.b16 %v160
    %v225 = vunpack.c.l.b16 %v161
    %v226 = vunpack.c.l.b16 %v162
    %v227 = vpack.c.b16 %v196, %v195
    %v228 = vpack.c.b16 %v198, %v197
    %v229 = vpack.c.b16 %v200, %v199
    %v230 = vpack.c.b16 %v202, %v201
    %v231 = vpack.c.b16 %v204, %v203
    %v232 = vpack.c.b16 %v206, %v205
    %v233 = vpack.c.b16 %v208, %v207
    %v234 = vpack.c.b16 %v210, %v209
    %v235 = vpack.c.b16 %v212, %v211
    %v236 = vpack.c.b16 %v214, %v213
    %v237 = vpack.c.b16 %v216, %v215
    %v238 = vpack.c.b16 %v218, %v217
    %v239 = vpack.c.b16 %v220, %v219
    %v240 = vpack.c.b16 %v222, %v221
    %v241 = vpack.c.b16 %v224, %v223
    %v242 = vpack.c.b16 %v226, %v225
    %259 = vmatprep.subr.bf16.mxu0 0
    %260 = vmatpush1.bf16.msra.mxu0 %v227
    %261 = vmatprep.subr.bf16.mxu0 0
    %262 = vmatpush1.bf16.msra.mxu0 %v228
    %263 = vmatprep.subr.bf16.mxu0 0
    %264 = vmatpush1.bf16.msra.mxu0 %v229
    %265 = vmatprep.subr.bf16.mxu0 0
    %266 = vmatpush1.bf16.msra.mxu0 %v230
    %267 = vmatprep.subr.bf16.mxu0 0
    %268 = vmatpush1.bf16.msra.mxu0 %v231
    %269 = vmatprep.subr.bf16.mxu0 0
    %270 = vmatpush1.bf16.msra.mxu0 %v232
    %271 = vmatprep.subr.bf16.mxu0 0
    %272 = vmatpush1.bf16.msra.mxu0 %v233
    %273 = vmatprep.subr.bf16.mxu0 0
    %274 = vmatpush1.bf16.msra.mxu0 %v234
    %275 = vmatprep.subr.bf16.mxu0 0
    %276 = vmatpush1.bf16.msra.mxu0 %v235
    %277 = vmatprep.subr.bf16.mxu0 0
    %278 = vmatpush1.bf16.msra.mxu0 %v236
    %279 = vmatprep.subr.bf16.mxu0 0
    %280 = vmatpush1.bf16.msra.mxu0 %v237
    %281 = vmatprep.subr.bf16.mxu0 0
    %282 = vmatpush1.bf16.msra.mxu0 %v238
    %283 = vmatprep.subr.bf16.mxu0 0
    %284 = vmatpush1.bf16.msra.mxu0 %v239
    %285 = vmatprep.subr.bf16.mxu0 0
    %286 = vmatpush1.bf16.msra.mxu0 %v240
    %287 = vmatprep.subr.bf16.mxu0 0
    %288 = vmatpush1.bf16.msra.mxu0 %v241
    %289 = vmatprep.subr.bf16.mxu0 0
    %290 = vmatpush1.bf16.msra.mxu0 %v242
    %291 = vmatprep.mubr.bf16.mxu0 %v128
    %292 = vmatmul.mubr.bf16.gmra.mrb[0].mxu0 %v127
    %v293 = vpop.f32.mrb[0].mxu0
    %v294 = vadd.f32 0.0, %v293
    %v295 = vpop.f32.mrb[0].mxu0
    %v296 = vpop.f32.mrb[0].mxu0
    %v297 = vadd.f32 0.0, %v296
    %v298 = vpop.f32.mrb[0].mxu0
    %299 = vmatprep.mubr.bf16.mxu0 %v130
    %300 = vmatmul.mubr.bf16.gmra.mrb[0].mxu0 %v129
    %v301 = vpop.f32.mrb[0].mxu0
    %v302 = vadd.f32 0.0, %v301
    %v303 = vpop.f32.mrb[0].mxu0
    %v304 = vpop.f32.mrb[0].mxu0
    %v305 = vpop.f32.mrb[0].mxu0
    %306 = vdwg.mxu0
    %307 = vst.msk [vmem:[#allocation2] sm:$0xff] %vm69, %v294
    %308 = vst.msk [vmem:[#allocation2 + $0x8] sm:$0xff] %vm69, %v297
    %309 = vst.msk [vmem:[#allocation2 + $0x10] sm:$0xff] %vm69, %v302
    // Predicated region
    $region14: #{tpu_custom_call.1} parent=1 // pred_check
      _
    $region15: #{tpu_custom_call.1} parent=1 // pred_check_branch
      %311 = sbr.rel (0) target = $region17
    $region16: #{tpu_custom_call.1} parent=1 // pred_region
      %s313 = ssub.s32 384, 384
      %314 = vsyncadd [#allocation3], %s313
      %s315 = sshll.u32 [#allocation2], 4
      %s316 = int_to_ptr.vmem [resolvable:$true] %s315
      %321 = dma.vmem_to_hbm [thread:$0]  %s316, 384, %s3, [#allocation3], 128, 128, 8
    $region17: #{tpu_custom_call.1} parent=1 // pred_fallthru
      _
    // Predicated region
    $region18: #{tpu_custom_call.1} parent=1 // pred_check
      _
    $region19: #{tpu_custom_call.1} parent=1 // pred_check_branch
      %323 = sbr.rel (0) target = $region21
    $region20: #{tpu_custom_call.1} parent=1 // pred_region
      %324 = dma.done [#allocation3], 384
    $region21: #{tpu_custom_call.1} parent=1 // pred_fallthru
      _
    %325 = vsyncpa [#allocation3], 1

</llo_original>
